<compile_context>
chip_gen: v5e
topology: v5e:2x2
jax: 0.10.0
libtpu: 0.0.40
codegen_flags: <defaults>
</compile_context>

<pallas_src>
import numpy as np
import jax
import jax.numpy as jnp
from jax.experimental import pallas as pl
from jax.experimental.pallas import tpu as pltpu

LOG_STD_MIN = -20.0
LOG_STD_MAX = 2.0


def _round_up(n, m):
    return ((n + m - 1) // m) * m


def policy_kernel(x_ref, w1_ref, b1_ref, w2_ref, b2_ref, w3_ref, b3_ref, out_ref):
    """One batch tile: 3 MXU matmuls + VPU relu/clip + EUP exp, all in VMEM.

    Weights may be bf16 (MXU-native); accumulation and all elementwise work
    stay f32.  Output columns [0, A) are means, [A, 2A) are stds.
    """
    cdt = w1_ref.dtype                      # matmul input dtype (f32 or bf16)
    x = x_ref[...]                          # already cast to cdt in wrapper

    h1 = jnp.dot(x, w1_ref[...], preferred_element_type=jnp.float32) + b1_ref[...]
    h1 = jnp.maximum(h1, 0.0)
    h2 = jnp.dot(h1.astype(cdt), w2_ref[...],
                 preferred_element_type=jnp.float32) + b2_ref[...]
    h2 = jnp.maximum(h2, 0.0)
    out = jnp.dot(h2.astype(cdt), w3_ref[...],
                  preferred_element_type=jnp.float32) + b3_ref[...]

    # Columns are already [mean_0..mean_{A-1} | log_std_0..log_std_{A-1}]
    # (permutation folded into W3/b3).  Compute exp(clip(.)) over the whole
    # tile (cheap EUP filler) and select per-column -> one full-width store.
    a = out_ref.shape[-1] // 2
    std_all = jnp.exp(jnp.clip(out, LOG_STD_MIN, LOG_STD_MAX))
    col = jax.lax.broadcasted_iota(jnp.int32, out.shape, dimension=1)
    out_ref[...] = jnp.where(col < a, out, std_all)


def prepare_params(params, action_dim, compute_dtype=jnp.float32):
    """One-time parameter glue: fold the `.view(-1, A, 2)` interleave into a
    column permutation of the last Linear layer and cast weights for the MXU.
    Biases stay f32 (they feed the f32 accumulate/elementwise path)."""
    w1, b1, w2, b2, w3, b3 = params
    perm = np.concatenate([np.arange(action_dim) * 2,        # mean columns
                           np.arange(action_dim) * 2 + 1])   # log_std columns
    w3p = jnp.asarray(w3)[:, perm]
    b3p = jnp.asarray(b3)[:, perm]
    cd = compute_dtype
    return (jnp.asarray(w1, cd), jnp.asarray(b1, jnp.float32),
            jnp.asarray(w2, cd), jnp.asarray(b2, jnp.float32),
            jnp.asarray(w3p, cd), jnp.asarray(b3p, jnp.float32))


def policy_net_forward(x, prepared_params, action_dim, *, block_b=256):
    """Returns (mean, std) of the Normal distribution produced by PolicyNet.

    `prepared_params` must come from prepare_params().  Batch is tiled in
    blocks of `block_b` rows; weights stay resident in VMEM across tiles."""
    w1, b1, w2, b2, w3, b3 = prepared_params
    B, state_dim = x.shape
    hidden = w1.shape[1]
    out_dim = 2 * action_dim

    # Pad batch to sublane (8) / tile boundary; padded rows are dropped below.
    tb = min(block_b, _round_up(B, 8))
    Bp = _round_up(B, tb)
    if Bp != B:
        x = jnp.pad(x, ((0, Bp - B), (0, 0)))
    xc = x.astype(w1.dtype)

    flops = 2 * Bp * (state_dim * hidden + hidden * hidden + hidden * out_dim)
    bytes_accessed = int(xc.nbytes + w1.nbytes + b1.nbytes + w2.nbytes +
                         b2.nbytes + w3.nbytes + b3.nbytes +
                         Bp * out_dim * 4)
    cost = pl.CostEstimate(flops=flops,
                           transcendentals=Bp * out_dim,
                           bytes_accessed=bytes_accessed)

    out = pl.pallas_call(
        policy_kernel,
        out_shape=jax.ShapeDtypeStruct((Bp, out_dim), jnp.float32),
        grid=(Bp // tb,),
        in_specs=[
            pl.BlockSpec((tb, state_dim), lambda i: (i, 0)),        # x tile
            pl.BlockSpec((state_dim, hidden), lambda i: (0, 0)),    # W1 (resident)
            pl.BlockSpec((1, hidden), lambda i: (0, 0)),            # b1
            pl.BlockSpec((hidden, hidden), lambda i: (0, 0)),       # W2
            pl.BlockSpec((1, hidden), lambda i: (0, 0)),            # b2
            pl.BlockSpec((hidden, out_dim), lambda i: (0, 0)),      # W3 (permuted)
            pl.BlockSpec((1, out_dim), lambda i: (0, 0)),           # b3 (permuted)
        ],
        out_specs=pl.BlockSpec((tb, out_dim), lambda i: (i, 0)),
        compiler_params=pltpu.CompilerParams(
            dimension_semantics=("parallel",)),                     # 2 TCs on v7x
        cost_estimate=cost,
    )(xc, w1, b1, w2, b2, w3, b3)

    mean = out[:B, :action_dim]
    std = out[:B, action_dim:]
    return mean, std


def init_params(key, state_dim, action_dim, hidden=256):
    """Deterministic PyTorch-style (uniform +-1/sqrt(fan_in)) init."""
    def linear(k, fan_in, fan_out):
        kw, kb = jax.random.split(k)
        bound = 1.0 / np.sqrt(fan_in)
        w = jax.random.uniform(kw, (fan_in, fan_out), jnp.float32, -bound, bound)
        b = jax.random.uniform(kb, (1, fan_out), jnp.float32, -bound, bound)
        return w, b

    k1, k2, k3 = jax.random.split(key, 3)
    w1, b1 = linear(k1, state_dim, hidden)
    w2, b2 = linear(k2, hidden, hidden)
    w3, b3 = linear(k3, hidden, action_dim * 2)
    return (w1, b1, w2, b2, w3, b3)


def policy_net_ref(x, params, action_dim):
    """Pure-JAX reference mirroring the PyTorch forward exactly."""
    w1, b1, w2, b2, w3, b3 = params
    h1 = jnp.maximum(x @ w1 + b1, 0.0)
    h2 = jnp.maximum(h1 @ w2 + b2, 0.0)
    out = (h2 @ w3 + b3).reshape(-1, action_dim, 2)
    mean, log_std = out[..., 0], out[..., 1]
    log_std = jnp.clip(log_std, LOG_STD_MIN, LOG_STD_MAX)
    return mean, jnp.exp(log_std)


# TODO(synk): PolicyNet.action() (rsample / tanh squash / log_prob correction)
# is stochastic sampling glue outside forward(); not implemented as a kernel.

if __name__ == "__main__":
    B, STATE_DIM, ACTION_DIM, HIDDEN = 8, 16, 4, 256

    key = jax.random.PRNGKey(0)
    kx, kp = jax.random.split(key)
    x = jax.random.normal(kx, (B, STATE_DIM), dtype=jnp.float32)
    params = init_params(kp, STATE_DIM, ACTION_DIM, HIDDEN)
    mean_ref, std_ref = policy_net_ref(x, params, ACTION_DIM)

    # --- f32 path: exact check against the reference ---
    p_f32 = prepare_params(params, ACTION_DIM, jnp.float32)
    mean, std = policy_net_forward(x, p_f32, ACTION_DIM)
    jax.block_until_ready((mean, std))
    assert np.allclose(np.asarray(mean), np.asarray(mean_ref), atol=1e-5)
    assert np.allclose(np.asarray(std), np.asarray(std_ref), atol=1e-5)

    # --- bf16-matmul path (f32 accumulate): looser tolerance ---
    p_bf16 = prepare_params(params, ACTION_DIM, jnp.bfloat16)
    mean_b, std_b = policy_net_forward(x, p_bf16, ACTION_DIM)
    jax.block_until_ready((mean_b, std_b))
    assert np.allclose(np.asarray(mean_b), np.asarray(mean_ref), atol=0.1, rtol=0.1)
    assert np.allclose(np.asarray(std_b), np.asarray(std_ref), atol=0.1, rtol=0.1)

    # --- non-tile-aligned rollout batch exercising the multi-tile batch grid ---
    B2 = 500
    x2 = jax.random.normal(kx, (B2, STATE_DIM), dtype=jnp.float32)
    mean2, std2 = policy_net_forward(x2, p_f32, ACTION_DIM, block_b=128)
    jax.block_until_ready((mean2, std2))
    mean2_ref, std2_ref = policy_net_ref(x2, params, ACTION_DIM)
    assert np.allclose(np.asarray(mean2), np.asarray(mean2_ref), atol=1e-5)
    assert np.allclose(np.asarray(std2), np.asarray(std2_ref), atol=1e-5)

    print("KERNEL_OK")
</pallas_src>

<mosaic_0001>
module attributes {stable_mosaic.version = 11 : i64} {
  func.func @policy_kernel(%arg0: i32, %arg1: memref<8x16xf32, #tpu.memory_space<vmem>>, %arg2: memref<16x256xf32, #tpu.memory_space<vmem>>, %arg3: memref<1x256xf32, #tpu.memory_space<vmem>>, %arg4: memref<256x256xf32, #tpu.memory_space<vmem>>, %arg5: memref<1x256xf32, #tpu.memory_space<vmem>>, %arg6: memref<256x8xf32, #tpu.memory_space<vmem>>, %arg7: memref<1x8xf32, #tpu.memory_space<vmem>>, %arg8: memref<8x8xf32, #tpu.memory_space<vmem>>) attributes {dimension_semantics = [#tpu.dimension_semantics<parallel>], iteration_bounds = array<i64: 1>, scalar_prefetch = 0 : i64, scratch_operands = 0 : i64, tpu.core_type = #tpu.core_type<tc>, window_params = [{transform_indices = @transform_0, window_bounds = array<i64: 8, 16>}, {pipeline_mode = #tpu.pipeline_mode<synchronous>, transform_indices = @transform_1, window_bounds = array<i64: 16, 256>}, {pipeline_mode = #tpu.pipeline_mode<synchronous>, transform_indices = @transform_2, window_bounds = array<i64: 1, 256>}, {pipeline_mode = #tpu.pipeline_mode<synchronous>, transform_indices = @transform_3, window_bounds = array<i64: 256, 256>}, {pipeline_mode = #tpu.pipeline_mode<synchronous>, transform_indices = @transform_4, window_bounds = array<i64: 1, 256>}, {pipeline_mode = #tpu.pipeline_mode<synchronous>, transform_indices = @transform_5, window_bounds = array<i64: 256, 8>}, {pipeline_mode = #tpu.pipeline_mode<synchronous>, transform_indices = @transform_6, window_bounds = array<i64: 1, 8>}, {transform_indices = @transform_7, window_bounds = array<i64: 8, 8>}]} {
    %c0 = arith.constant 0 : index
    %c0_0 = arith.constant 0 : index
    %0 = vector.load %arg1[%c0, %c0_0] : memref<8x16xf32, #tpu.memory_space<vmem>>, vector<8x16xf32>
    %c0_1 = arith.constant 0 : index
    %c0_2 = arith.constant 0 : index
    %1 = vector.load %arg2[%c0_1, %c0_2] : memref<16x256xf32, #tpu.memory_space<vmem>>, vector<16x256xf32>
    %cst = arith.constant dense<0.000000e+00> : vector<8x256xf32>
    %2 = tpu.matmul %0, %1, %cst {dimension_numbers = #tpu.dot_dimension_numbers<[1], [0], [0], [1], [0, 0, 1, 1], [], []>} : vector<8x16xf32>, vector<16x256xf32>, vector<8x256xf32> -> vector<8x256xf32>
    %c0_3 = arith.constant 0 : index
    %c0_4 = arith.constant 0 : index
    %3 = vector.load %arg3[%c0_3, %c0_4] : memref<1x256xf32, #tpu.memory_space<vmem>>, vector<1x256xf32>
    %4 = vector.broadcast %3 : vector<1x256xf32> to vector<8x256xf32>
    %5 = arith.addf %2, %4 : vector<8x256xf32>
    %cst_5 = arith.constant 0.000000e+00 : f32
    %6 = vector.broadcast %cst_5 : f32 to vector<8x256xf32>
    %7 = arith.maximumf %5, %6 : vector<8x256xf32>
    %c0_6 = arith.constant 0 : index
    %c0_7 = arith.constant 0 : index
    %8 = vector.load %arg4[%c0_6, %c0_7] : memref<256x256xf32, #tpu.memory_space<vmem>>, vector<256x256xf32>
    %cst_8 = arith.constant dense<0.000000e+00> : vector<8x256xf32>
    %9 = tpu.matmul %7, %8, %cst_8 {dimension_numbers = #tpu.dot_dimension_numbers<[1], [0], [0], [1], [0, 0, 1, 1], [], []>} : vector<8x256xf32>, vector<256x256xf32>, vector<8x256xf32> -> vector<8x256xf32>
    %c0_9 = arith.constant 0 : index
    %c0_10 = arith.constant 0 : index
    %10 = vector.load %arg5[%c0_9, %c0_10] : memref<1x256xf32, #tpu.memory_space<vmem>>, vector<1x256xf32>
    %11 = vector.broadcast %10 : vector<1x256xf32> to vector<8x256xf32>
    %12 = arith.addf %9, %11 : vector<8x256xf32>
    %cst_11 = arith.constant 0.000000e+00 : f32
    %13 = vector.broadcast %cst_11 : f32 to vector<8x256xf32>
    %14 = arith.maximumf %12, %13 : vector<8x256xf32>
    %c0_12 = arith.constant 0 : index
    %c0_13 = arith.constant 0 : index
    %15 = vector.load %arg6[%c0_12, %c0_13] : memref<256x8xf32, #tpu.memory_space<vmem>>, vector<256x8xf32>
    %cst_14 = arith.constant dense<0.000000e+00> : vector<8x8xf32>
    %16 = tpu.matmul %14, %15, %cst_14 {dimension_numbers = #tpu.dot_dimension_numbers<[1], [0], [0], [1], [0, 0, 1, 1], [], []>} : vector<8x256xf32>, vector<256x8xf32>, vector<8x8xf32> -> vector<8x8xf32>
    %c0_15 = arith.constant 0 : index
    %c0_16 = arith.constant 0 : index
    %17 = vector.load %arg7[%c0_15, %c0_16] : memref<1x8xf32, #tpu.memory_space<vmem>>, vector<1x8xf32>
    %18 = vector.broadcast %17 : vector<1x8xf32> to vector<8x8xf32>
    %19 = arith.addf %16, %18 : vector<8x8xf32>
    %cst_17 = arith.constant -2.000000e+01 : f32
    %cst_18 = arith.constant 2.000000e+00 : f32
    %20 = vector.broadcast %cst_17 : f32 to vector<8x8xf32>
    %21 = arith.maximumf %20, %19 : vector<8x8xf32>
    %22 = vector.broadcast %cst_18 : f32 to vector<8x8xf32>
    %23 = arith.minimumf %22, %21 : vector<8x8xf32>
    %24 = math.exp %23 : vector<8x8xf32>
    %25 = tpu.iota {dimensions = array<i32: 1>} : vector<8x8xi32>
    %c4_i32 = arith.constant 4 : i32
    %26 = vector.broadcast %c4_i32 : i32 to vector<8x8xi32>
    %27 = arith.cmpi slt, %25, %26 : vector<8x8xi32>
    %28 = arith.select %27, %19, %24 : vector<8x8xi1>, vector<8x8xf32>
    %c0_19 = arith.constant 0 : index
    %c0_20 = arith.constant 0 : index
    %29 = vector.load %arg8[%c0_19, %c0_20] : memref<8x8xf32, #tpu.memory_space<vmem>>, vector<8x8xf32>
    tpu.vector_store %arg8[%c0_19, %c0_20], %28 {strides = array<i32>} : memref<8x8xf32, #tpu.memory_space<vmem>>, vector<8x8xf32>,
    return
  }
  func.func @transform_0(%arg0: i32) -> (i32, i32) {
    %c0_i32 = arith.constant 0 : i32
    %c0_i32_0 = arith.constant 0 : i32
    return %arg0, %c0_i32 : i32, i32
  }
  func.func @transform_1(%arg0: i32) -> (i32, i32) {
    %c0_i32 = arith.constant 0 : i32
    %c0_i32_0 = arith.constant 0 : i32
    %c0_i32_1 = arith.constant 0 : i32
    return %c0_i32, %c0_i32_0 : i32, i32
  }
  func.func @transform_2(%arg0: i32) -> (i32, i32) {
    %c0_i32 = arith.constant 0 : i32
    %c0_i32_0 = arith.constant 0 : i32
    %c0_i32_1 = arith.constant 0 : i32
    return %c0_i32, %c0_i32_0 : i32, i32
  }
  func.func @transform_3(%arg0: i32) -> (i32, i32) {
    %c0_i32 = arith.constant 0 : i32
    %c0_i32_0 = arith.constant 0 : i32
    %c0_i32_1 = arith.constant 0 : i32
    return %c0_i32, %c0_i32_0 : i32, i32
  }
  func.func @transform_4(%arg0: i32) -> (i32, i32) {
    %c0_i32 = arith.constant 0 : i32
    %c0_i32_0 = arith.constant 0 : i32
    %c0_i32_1 = arith.constant 0 : i32
    return %c0_i32, %c0_i32_0 : i32, i32
  }
  func.func @transform_5(%arg0: i32) -> (i32, i32) {
    %c0_i32 = arith.constant 0 : i32
    %c0_i32_0 = arith.constant 0 : i32
    %c0_i32_1 = arith.constant 0 : i32
    return %c0_i32, %c0_i32_0 : i32, i32
  }
  func.func @transform_6(%arg0: i32) -> (i32, i32) {
    %c0_i32 = arith.constant 0 : i32
    %c0_i32_0 = arith.constant 0 : i32
    %c0_i32_1 = arith.constant 0 : i32
    return %c0_i32, %c0_i32_0 : i32, i32
  }
  func.func @transform_7(%arg0: i32) -> (i32, i32) {
    %c0_i32 = arith.constant 0 : i32
    %c0_i32_0 = arith.constant 0 : i32
    return %arg0, %c0_i32 : i32, i32
  }
}

</mosaic_0001>

<llo_original>
// kernel: tpu_custom_call.1
$region0: #{tpu_custom_call.1}
  #allocation0 [shape = 'u32[]', space=smem, size = 0x4, offset = 0x4, fixed_abs, tag = 'smem constant byte address 0x4 - core index']
  #allocation1 [shape = 'u32[72,128]{1,0:T(1,128)}', space=vmem, size = 0x9000, scoped, tag = 'internal scratch']
  %s0 = inlined_call_operand.vmem [shape: f32[8,16], index: 0, kind: input, shape index: {}]
  %s1 = inlined_call_operand.vmem [shape: f32[16,256], index: 1, kind: input, shape index: {}]
  %s2 = inlined_call_operand.vmem [shape: f32[1,256], index: 2, kind: input, shape index: {}]
  %s3 = inlined_call_operand.hbm [shape: f32[256,256], index: 3, kind: input, shape index: {}]
  %s4 = inlined_call_operand.vmem [shape: f32[1,256], index: 4, kind: input, shape index: {}]
  %s5 = inlined_call_operand.vmem [shape: f32[256,8], index: 5, kind: input, shape index: {}]
  %s6 = inlined_call_operand.vmem [shape: f32[1,8], index: 6, kind: input, shape index: {}]
  %s7 = inlined_call_operand.hbm [shape: f32[8,8], index: 7, kind: output, shape index: {}]
  %s8 = sld [smem:[#allocation0]]
  $region42: #{tpu_custom_call.1} parent=0
    _
  %s10 = ssub.s32 1, %s8
  %s11 = scalar_select 0, %s10, %s8
  $region1: #{tpu_custom_call.1} parent=0
    #allocation2 [shape = 'u8[262144]{0}', space=vmem, size = 0x40000, scoped, tag = 'input window, operand 3, single buffered']
    #allocation3 [shape = 's32[1]{0}', space=sflag, size = 0x4, scoped, tag = 'scoped memory for tpu_custom_call.1']
    #allocation4 [shape = 's32[1]{0}', space=sflag, size = 0x4, scoped, tag = 'scoped memory for tpu_custom_call.1']
    #allocation5 [shape = 'u8[4096]{0}', space=vmem, size = 0x1000, scoped, tag = 'output window, operand 0, single buffered']
    %12 = vsyncpa [#allocation3], 0
    %13 = vsyncpa [#allocation4], 0
    // Predicated region
    $region2: #{tpu_custom_call.1} parent=1 // pred_check
      _
    $region3: #{tpu_custom_call.1} parent=1 // pred_check_branch
      %15 = sbr.rel (0) target = $region5
    $region4: #{tpu_custom_call.1} parent=1 // pred_region
      _
    $region5: #{tpu_custom_call.1} parent=1 // pred_fallthru
      _
    // Predicated region
    $region6: #{tpu_custom_call.1} parent=1 // pred_check
      _
    $region7: #{tpu_custom_call.1} parent=1 // pred_check_branch
      %17 = sbr.rel (0) target = $region9
    $region8: #{tpu_custom_call.1} parent=1 // pred_region
      _
    $region9: #{tpu_custom_call.1} parent=1 // pred_fallthru
      _
    // Predicated region
    $region10: #{tpu_custom_call.1} parent=1 // pred_check
      _
    $region11: #{tpu_custom_call.1} parent=1 // pred_check_branch
      %19 = sbr.rel (0) target = $region13
    $region12: #{tpu_custom_call.1} parent=1 // pred_region
      _
    $region13: #{tpu_custom_call.1} parent=1 // pred_fallthru
      _
    // Predicated region
    $region14: #{tpu_custom_call.1} parent=1 // pred_check
      _
    $region15: #{tpu_custom_call.1} parent=1 // pred_check_branch
      %21 = sbr.rel (0) target = $region17
    $region16: #{tpu_custom_call.1} parent=1 // pred_region
      %23 = vsyncadd [#allocation3], 0
      %s24 = sshll.u32 %s3, 4
      %s25 = int_to_ptr.hbm [resolvable:$true] %s24
      %s26 = sshll.u32 [#allocation2], 4
      %s27 = int_to_ptr.vmem [resolvable:$true] %s26
      %32 = dma.hbm_to_vmem [thread:$0]  %s25, 8192, %s27, [#allocation3], 256, 256, 16
    $region17: #{tpu_custom_call.1} parent=1 // pred_fallthru
      _
    // Predicated region
    $region18: #{tpu_custom_call.1} parent=1 // pred_check
      _
    $region19: #{tpu_custom_call.1} parent=1 // pred_check_branch
      %34 = sbr.rel (0) target = $region21
    $region20: #{tpu_custom_call.1} parent=1 // pred_region
      _
    $region21: #{tpu_custom_call.1} parent=1 // pred_fallthru
      _
    // Predicated region
    $region22: #{tpu_custom_call.1} parent=1 // pred_check
      _
    $region23: #{tpu_custom_call.1} parent=1 // pred_check_branch
      %36 = sbr.rel (0) target = $region25
    $region24: #{tpu_custom_call.1} parent=1 // pred_region
      _
    $region25: #{tpu_custom_call.1} parent=1 // pred_fallthru
      _
    // Predicated region
    $region26: #{tpu_custom_call.1} parent=1 // pred_check
      _
    $region27: #{tpu_custom_call.1} parent=1 // pred_check_branch
      %38 = sbr.rel (0) target = $region29
    $region28: #{tpu_custom_call.1} parent=1 // pred_region
      _
    $region29: #{tpu_custom_call.1} parent=1 // pred_fallthru
      _
    // Predicated region
    $region30: #{tpu_custom_call.1} parent=1 // pred_check
      _
    $region31: #{tpu_custom_call.1} parent=1 // pred_check_branch
      %40 = sbr.rel (0) target = $region33
    $region32: #{tpu_custom_call.1} parent=1 // pred_region
      %42 = dma.done [#allocation3], 8192
    $region33: #{tpu_custom_call.1} parent=1 // pred_fallthru
      _
    %v43 = vld [vmem:[%s0] sm:$0xff]
    %v44 = vld [vmem:[%s1] sm:$0xff]
    %v45 = vld [vmem:[%s1 + $0x8] sm:$0xff]
    %v46 = vld [vmem:[%s1 + $0x10] sm:$0xff]
    %v47 = vld [vmem:[%s1 + $0x18] sm:$0xff]
    %v48 = vld [vmem:[%s2] sm:$0x3]
    %v50 = vperm.slane %v48, 0
    %v51 = vperm.slane %v48, 1
    %vm54 = vcmask 130048
    %v56 = vsel %vm54, %v43, 0
    %58 = vmatpush.msra.mxu0 0.0
    %59 = vmatpush.msra.mxu0 0.0
    %60 = vmatpush.msra.mxu0 0.0
    %61 = vmatpush.msra.mxu0 0.0
    %62 = vmatpush.msra.mxu0 0.0
    %63 = vmatpush.msra.mxu0 0.0
    %64 = vmatpush.msra.mxu0 0.0
    %65 = vmatpush.msra.mxu0 0.0
    %66 = vmatpush.msra.mxu0 0.0
    %67 = vmatpush.msra.mxu0 0.0
    %68 = vmatpush.msra.mxu0 0.0
    %69 = vmatpush.msra.mxu0 0.0
    %70 = vmatpush.msra.mxu0 0.0
    %71 = vmatpush.msra.mxu0 0.0
    %72 = vmatpush.msra.mxu0 %v46
    %73 = vmatpush.msra.mxu0 %v44
    %74 = vmatmul.f32.gmra.mxu0 %v56
    %v75 = vpop.f32.mrf.mxu0
    %v76 = vadd.f32 %v50, %v75
    %77 = vdwg.mxu0
    %78 = vmatpush.msra.mxu0 0.0
    %79 = vmatpush.msra.mxu0 0.0
    %80 = vmatpush.msra.mxu0 0.0
    %81 = vmatpush.msra.mxu0 0.0
    %82 = vmatpush.msra.mxu0 0.0
    %83 = vmatpush.msra.mxu0 0.0
    %84 = vmatpush.msra.mxu0 0.0
    %85 = vmatpush.msra.mxu0 0.0
    %86 = vmatpush.msra.mxu0 0.0
    %87 = vmatpush.msra.mxu0 0.0
    %88 = vmatpush.msra.mxu0 0.0
    %89 = vmatpush.msra.mxu0 0.0
    %90 = vmatpush.msra.mxu0 0.0
    %91 = vmatpush.msra.mxu0 0.0
    %92 = vmatpush.msra.mxu0 %v47
    %93 = vmatpush.msra.mxu0 %v45
    %94 = vmatmul.f32.gmra.mxu0 %v56
    %v95 = vpop.f32.mrf.mxu0
    %v96 = vadd.f32 %v51, %v95
    %97 = vdwg.mxu0
    %v98 = vmax.f32 %v76, 0.0
    %v99 = vmax.f32 %v96, 0.0
    %v100 = vld [vmem:[#allocation2] sm:$0xff]
    %v101 = vld [vmem:[#allocation2 + $0x8] sm:$0xff]
    %v102 = vld [vmem:[#allocation2 + $0x10] sm:$0xff]
    %v103 = vld [vmem:[#allocation2 + $0x18] sm:$0xff]
    %v104 = vld [vmem:[#allocation2 + $0x20] sm:$0xff]
    %v105 = vld [vmem:[#allocation2 + $0x28] sm:$0xff]
    %v106 = vld [vmem:[#allocation2 + $0x30] sm:$0xff]
    %v107 = vld [vmem:[#allocation2 + $0x38] sm:$0xff]
    %v108 = vld [vmem:[#allocation2 + $0x40] sm:$0xff]
    %v109 = vld [vmem:[#allocation2 + $0x48] sm:$0xff]
    %v110 = vld [vmem:[#allocation2 + $0x50] sm:$0xff]
    %v111 = vld [vmem:[#allocation2 + $0x58] sm:$0xff]
    %v112 = vld [vmem:[#allocation2 + $0x60] sm:$0xff]
    %v113 = vld [vmem:[#allocation2 + $0x68] sm:$0xff]
    %v114 = vld [vmem:[#allocation2 + $0x70] sm:$0xff]
    %v115 = vld [vmem:[#allocation2 + $0x78] sm:$0xff]
    %v116 = vld [vmem:[#allocation2 + $0x80] sm:$0xff]
    %v117 = vld [vmem:[#allocation2 + $0x88] sm:$0xff]
    %v118 = vld [vmem:[#allocation2 + $0x90] sm:$0xff]
    %v119 = vld [vmem:[#allocation2 + $0x98] sm:$0xff]
    %v120 = vld [vmem:[#allocation2 + $0xa0] sm:$0xff]
    %v121 = vld [vmem:[#allocation2 + $0xa8] sm:$0xff]
    %v122 = vld [vmem:[#allocation2 + $0xb0] sm:$0xff]
    %v123 = vld [vmem:[#allocation2 + $0xb8] sm:$0xff]
    %v124 = vld [vmem:[#allocation2 + $0xc0] sm:$0xff]
    %v125 = vld [vmem:[#allocation2 + $0xc8] sm:$0xff]
    %v126 = vld [vmem:[#allocation2 + $0xd0] sm:$0xff]
    %v127 = vld [vmem:[#allocation2 + $0xd8] sm:$0xff]
    %v128 = vld [vmem:[#allocation2 + $0xe0] sm:$0xff]
    %v129 = vld [vmem:[#allocation2 + $0xe8] sm:$0xff]
    %v130 = vld [vmem:[#allocation2 + $0xf0] sm:$0xff]
    %v131 = vld [vmem:[#allocation2 + $0xf8] sm:$0xff]
    %v132 = vld [vmem:[#allocation2 + $0x100] sm:$0xff]
    %v133 = vld [vmem:[#allocation2 + $0x108] sm:$0xff]
    %v134 = vld [vmem:[#allocation2 + $0x110] sm:$0xff]
    %v135 = vld [vmem:[#allocation2 + $0x118] sm:$0xff]
    %v136 = vld [vmem:[#allocation2 + $0x120] sm:$0xff]
    %v137 = vld [vmem:[#allocation2 + $0x128] sm:$0xff]
    %v138 = vld [vmem:[#allocation2 + $0x130] sm:$0xff]
    %v139 = vld [vmem:[#allocation2 + $0x138] sm:$0xff]
    %v140 = vld [vmem:[#allocation2 + $0x140] sm:$0xff]
    %v141 = vld [vmem:[#allocation2 + $0x148] sm:$0xff]
    %v142 = vld [vmem:[#allocation2 + $0x150] sm:$0xff]
    %v143 = vld [vmem:[#allocation2 + $0x158] sm:$0xff]
    %v144 = vld [vmem:[#allocation2 + $0x160] sm:$0xff]
    %v145 = vld [vmem:[#allocation2 + $0x168] sm:$0xff]
    %v146 = vld [vmem:[#allocation2 + $0x170] sm:$0xff]
    %v147 = vld [vmem:[#allocation2 + $0x178] sm:$0xff]
    %v148 = vld [vmem:[#allocation2 + $0x180] sm:$0xff]
    %v149 = vld [vmem:[#allocation2 + $0x188] sm:$0xff]
    %v150 = vld [vmem:[#allocation2 + $0x190] sm:$0xff]
    %v151 = vld [vmem:[#allocation2 + $0x198] sm:$0xff]
    %v152 = vld [vmem:[#allocation2 + $0x1a0] sm:$0xff]
    %v153 = vld [vmem:[#allocation2 + $0x1a8] sm:$0xff]
    %v154 = vld [vmem:[#allocation2 + $0x1b0] sm:$0xff]
    %v155 = vld [vmem:[#allocation2 + $0x1b8] sm:$0xff]
    %v156 = vld [vmem:[#allocation2 + $0x1c0] sm:$0xff]
    %v157 = vld [vmem:[#allocation2 + $0x1c8] sm:$0xff]
    %v158 = vld [vmem:[#allocation2 + $0x1d0] sm:$0xff]
    %v159 = vld [vmem:[#allocation2 + $0x1d8] sm:$0xff]
    %v160 = vld [vmem:[#allocation2 + $0x1e0] sm:$0xff]
    %v161 = vld [vmem:[#allocation2 + $0x1e8] sm:$0xff]
    %v162 = vld [vmem:[#allocation2 + $0x1f0] sm:$0xff]
    %v163 = vld [vmem:[#allocation2 + $0x1f8] sm:$0xff]
    %v164 = vld [vmem:[%s4] sm:$0x3]
    %v166 = vperm.slane %v164, 0
    %v167 = vperm.slane %v164, 1
    %170 = vmatpush.msra.mxu0 %v130
    %171 = vmatpush.msra.mxu0 %v128
    %172 = vmatpush.msra.mxu0 %v126
    %173 = vmatpush.msra.mxu0 %v124
    %174 = vmatpush.msra.mxu0 %v122
    %175 = vmatpush.msra.mxu0 %v120
    %176 = vmatpush.msra.mxu0 %v118
    %177 = vmatpush.msra.mxu0 %v116
    %178 = vmatpush.msra.mxu0 %v114
    %179 = vmatpush.msra.mxu0 %v112
    %180 = vmatpush.msra.mxu0 %v110
    %181 = vmatpush.msra.mxu0 %v108
    %182 = vmatpush.msra.mxu0 %v106
    %183 = vmatpush.msra.mxu0 %v104
    %184 = vmatpush.msra.mxu0 %v102
    %185 = vmatpush.msra.mxu0 %v100
    %186 = vmatmul.f32.gmra.mxu0 %v98
    %v187 = vpop.f32.mrf.mxu0
    %v188 = vadd.f32 %v166, %v187
    %189 = vdwg.mxu0
    %190 = vmatpush.msra.mxu0 %v162
    %191 = vmatpush.msra.mxu0 %v160
    %192 = vmatpush.msra.mxu0 %v158
    %193 = vmatpush.msra.mxu0 %v156
    %194 = vmatpush.msra.mxu0 %v154
    %195 = vmatpush.msra.mxu0 %v152
    %196 = vmatpush.msra.mxu0 %v150
    %197 = vmatpush.msra.mxu0 %v148
    %198 = vmatpush.msra.mxu0 %v146
    %199 = vmatpush.msra.mxu0 %v144
    %200 = vmatpush.msra.mxu0 %v142
    %201 = vmatpush.msra.mxu0 %v140
    %202 = vmatpush.msra.mxu0 %v138
    %203 = vmatpush.msra.mxu0 %v136
    %204 = vmatpush.msra.mxu0 %v134
    %205 = vmatpush.msra.mxu0 %v132
    %206 = vmatmul.f32.gmra.mxu0 %v99
    %v207 = vpop.f32.mrf.mxu0
    %v208 = vadd.f32 %v188, %v207
    %209 = vdwg.mxu0
    %210 = vmatpush.msra.mxu0 %v131
    %211 = vmatpush.msra.mxu0 %v129
    %212 = vmatpush.msra.mxu0 %v127
    %213 = vmatpush.msra.mxu0 %v125
    %214 = vmatpush.msra.mxu0 %v123
    %215 = vmatpush.msra.mxu0 %v121
    %216 = vmatpush.msra.mxu0 %v119
    %217 = vmatpush.msra.mxu0 %v117
    %218 = vmatpush.msra.mxu0 %v115
    %219 = vmatpush.msra.mxu0 %v113
    %220 = vmatpush.msra.mxu0 %v111
    %221 = vmatpush.msra.mxu0 %v109
    %222 = vmatpush.msra.mxu0 %v107
    %223 = vmatpush.msra.mxu0 %v105
    %224 = vmatpush.msra.mxu0 %v103
    %225 = vmatpush.msra.mxu0 %v101
    %226 = vmatmul.f32.gmra.mxu0 %v98
    %v227 = vpop.f32.mrf.mxu0
    %v228 = vadd.f32 %v167, %v227
    %229 = vdwg.mxu0
    %230 = vmatpush.msra.mxu0 %v163
    %231 = vmatpush.msra.mxu0 %v161
    %232 = vmatpush.msra.mxu0 %v159
    %233 = vmatpush.msra.mxu0 %v157
    %234 = vmatpush.msra.mxu0 %v155
    %235 = vmatpush.msra.mxu0 %v153
    %236 = vmatpush.msra.mxu0 %v151
    %237 = vmatpush.msra.mxu0 %v149
    %238 = vmatpush.msra.mxu0 %v147
    %239 = vmatpush.msra.mxu0 %v145
    %240 = vmatpush.msra.mxu0 %v143
    %241 = vmatpush.msra.mxu0 %v141
    %242 = vmatpush.msra.mxu0 %v139
    %243 = vmatpush.msra.mxu0 %v137
    %244 = vmatpush.msra.mxu0 %v135
    %245 = vmatpush.msra.mxu0 %v133
    %246 = vmatmul.f32.gmra.mxu0 %v99
    %v247 = vpop.f32.mrf.mxu0
    %v248 = vadd.f32 %v228, %v247
    %249 = vdwg.mxu0
    %v250 = vmax.f32 %v208, 0.0
    %v251 = vmax.f32 %v248, 0.0
    %v252 = vld [vmem:[%s5] sm:$0xff]
    %v253 = vld [vmem:[%s5 + $0x8] sm:$0xff]
    %v254 = vld [vmem:[%s5 + $0x10] sm:$0xff]
    %v255 = vld [vmem:[%s5 + $0x18] sm:$0xff]
    %v256 = vld [vmem:[%s5 + $0x20] sm:$0xff]
    %v257 = vld [vmem:[%s5 + $0x28] sm:$0xff]
    %v258 = vld [vmem:[%s5 + $0x30] sm:$0xff]
    %v259 = vld [vmem:[%s5 + $0x38] sm:$0xff]
    %v260 = vld [vmem:[%s5 + $0x40] sm:$0xff]
    %v261 = vld [vmem:[%s5 + $0x48] sm:$0xff]
    %v262 = vld [vmem:[%s5 + $0x50] sm:$0xff]
    %v263 = vld [vmem:[%s5 + $0x58] sm:$0xff]
    %v264 = vld [vmem:[%s5 + $0x60] sm:$0xff]
    %v265 = vld [vmem:[%s5 + $0x68] sm:$0xff]
    %v266 = vld [vmem:[%s5 + $0x70] sm:$0xff]
    %v267 = vld [vmem:[%s5 + $0x78] sm:$0xff]
    %v268 = vld [vmem:[%s5 + $0x80] sm:$0xff]
    %v269 = vld [vmem:[%s5 + $0x88] sm:$0xff]
    %v270 = vld [vmem:[%s5 + $0x90] sm:$0xff]
    %v271 = vld [vmem:[%s5 + $0x98] sm:$0xff]
    %v272 = vld [vmem:[%s5 + $0xa0] sm:$0xff]
    %v273 = vld [vmem:[%s5 + $0xa8] sm:$0xff]
    %v274 = vld [vmem:[%s5 + $0xb0] sm:$0xff]
    %v275 = vld [vmem:[%s5 + $0xb8] sm:$0xff]
    %v276 = vld [vmem:[%s5 + $0xc0] sm:$0xff]
    %v277 = vld [vmem:[%s5 + $0xc8] sm:$0xff]
    %v278 = vld [vmem:[%s5 + $0xd0] sm:$0xff]
    %v279 = vld [vmem:[%s5 + $0xd8] sm:$0xff]
    %v280 = vld [vmem:[%s5 + $0xe0] sm:$0xff]
    %v281 = vld [vmem:[%s5 + $0xe8] sm:$0xff]
    %v282 = vld [vmem:[%s5 + $0xf0] sm:$0xff]
    %v283 = vld [vmem:[%s5 + $0xf8] sm:$0xff]
    %v284 = vld [vmem:[%s6] sm:$0x1]
    %v286 = vperm.slane %v284, 0
    %288 = vmatpush.msra.mxu0 %v267
    %289 = vmatpush.msra.mxu0 %v266
    %290 = vmatpush.msra.mxu0 %v265
    %291 = vmatpush.msra.mxu0 %v264
    %292 = vmatpush.msra.mxu0 %v263
    %293 = vmatpush.msra.mxu0 %v262
    %294 = vmatpush.msra.mxu0 %v261
    %295 = vmatpush.msra.mxu0 %v260
    %296 = vmatpush.msra.mxu0 %v259
    %297 = vmatpush.msra.mxu0 %v258
    %298 = vmatpush.msra.mxu0 %v257
    %299 = vmatpush.msra.mxu0 %v256
    %300 = vmatpush.msra.mxu0 %v255
    %301 = vmatpush.msra.mxu0 %v254
    %302 = vmatpush.msra.mxu0 %v253
    %303 = vmatpush.msra.mxu0 %v252
    %304 = vmatmul.f32.gmra.mxu0 %v250
    %v305 = vpop.f32.mrf.mxu0
    %v306 = vadd.f32 %v286, %v305
    %307 = vdwg.mxu0
    %308 = vmatpush.msra.mxu0 %v283
    %309 = vmatpush.msra.mxu0 %v282
    %310 = vmatpush.msra.mxu0 %v281
    %311 = vmatpush.msra.mxu0 %v280
    %312 = vmatpush.msra.mxu0 %v279
    %313 = vmatpush.msra.mxu0 %v278
    %314 = vmatpush.msra.mxu0 %v277
    %315 = vmatpush.msra.mxu0 %v276
    %316 = vmatpush.msra.mxu0 %v275
    %317 = vmatpush.msra.mxu0 %v274
    %318 = vmatpush.msra.mxu0 %v273
    %319 = vmatpush.msra.mxu0 %v272
    %320 = vmatpush.msra.mxu0 %v271
    %321 = vmatpush.msra.mxu0 %v270
    %322 = vmatpush.msra.mxu0 %v269
    %323 = vmatpush.msra.mxu0 %v268
    %324 = vmatmul.f32.gmra.mxu0 %v251
    %v325 = vpop.f32.mrf.mxu0
    %v326 = vadd.f32 %v306, %v325
    %327 = vdwg.mxu0
    %v328 = vmax.f32 %v326, -20.0
    %v329 = vmin.f32 %v328, 2.0
    %v330 = vmul.f32 %v329, 1.442695
    %v331 = vpow.pop %v330
    %v332 = vlaneseq
    %v333 = vand.u32 %v332, 127
    %vm334 = vcmp.lt.s32.totalorder %v333, 4
    %v335 = vsel %vm334, %v326, %v331
    %vm336 = vcmask 64512
    %337 = vst.msk [vmem:[#allocation5] sm:$0xff] %vm336, %v335
    // Predicated region
    $region34: #{tpu_custom_call.1} parent=1 // pred_check
      _
    $region35: #{tpu_custom_call.1} parent=1 // pred_check_branch
      %339 = sbr.rel (0) target = $region37
    $region36: #{tpu_custom_call.1} parent=1 // pred_region
      %341 = vsyncadd [#allocation4], 0
      %s343 = sshll.u32 [#allocation5], 4
      %s344 = int_to_ptr.vmem [resolvable:$true] %s343
      %s345 = sshll.u32 %s7, 4
      %s346 = int_to_ptr.hbm [resolvable:$true] %s345
      %348 = dma.vmem_to_hbm [thread:$0]  %s344, 128, %s346, [#allocation4]
    $region37: #{tpu_custom_call.1} parent=1 // pred_fallthru
      _
    // Predicated region
    $region38: #{tpu_custom_call.1} parent=1 // pred_check
      _
    $region39: #{tpu_custom_call.1} parent=1 // pred_check_branch
      %350 = sbr.rel (0) target = $region41
    $region40: #{tpu_custom_call.1} parent=1 // pred_region
      %352 = dma.done [#allocation4], 128
    $region41: #{tpu_custom_call.1} parent=1 // pred_fallthru
      _
    %353 = vsyncpa [#allocation3], 1
    %354 = vsyncpa [#allocation4], 1

</llo_original>
